<compile_context>
chip_gen: v7x
topology: tpu7x:2x2x1
jax: 0.10.0
libtpu: 0.0.40
codegen_flags: <defaults>
</compile_context>

<pallas_src>
import functools

import jax
import jax.numpy as jnp
import numpy as np
from jax.experimental import pallas as pl
from jax.experimental.pallas import tpu as pltpu


# -----------------------------------------------------------------------------
# helpers
# -----------------------------------------------------------------------------
def _round_up(x, m):
    return ((x + m - 1) // m) * m


def _choose_tile_n(n):
    # Multiple of 16 (bf16 sublane friendly); cap at 2048 so the dominant live temp
    # (the (TN,1024) f32 conv3 tile, 8 MiB at TN=2048) keeps the working set ~12 MiB.
    return min(2048, _round_up(n, 16))


# -----------------------------------------------------------------------------
# Fused conv1/conv2/conv3 (+ folded BN) + max-over-points kernel
# -----------------------------------------------------------------------------
def _fused_conv_max_kernel(x_ref, w1_ref, sh1_ref, w2_ref, sh2_ref, w3_ref,
                           *out_refs, emit_pointfeat):
    # x_ref: (1, TN, Cin) bf16; w1_ref: (1, Cin, 64) bf16; w2_ref: (64,128) bf16;
    # w3_ref: (128,1024) bf16 (BN scales already folded into all weights).
    # out_refs[0]: (1, 1, 1024) f32 running-max accumulator (resident across the N-tile axis).
    # out_refs[1]: (1, 64, TN) f32 channel-major pointfeat (only when emit_pointfeat).
    gmax_ref = out_refs[0]
    nt = pl.program_id(2)

    x = x_ref[0]                                                       # (TN, Cin) bf16
    h = jnp.dot(x, w1_ref[0], preferred_element_type=jnp.float32)      # (TN, 64)
    h = jnp.maximum(h + sh1_ref[...], 0.0)
    if emit_pointfeat:
        out_refs[1][0] = h.T                                           # lane-dense store

    h = jnp.dot(h.astype(jnp.bfloat16), w2_ref[...],
                preferred_element_type=jnp.float32)                    # (TN, 128)
    h = jnp.maximum(h + sh2_ref[...], 0.0)

    h = jnp.dot(h.astype(jnp.bfloat16), w3_ref[...],
                preferred_element_type=jnp.float32)                    # (TN, 1024)
    # conv3 shift (and the STN branch's relu) are hoisted past the max -> no epilogue here.

    tile_max = jnp.max(h, axis=0, keepdims=True)                       # (1, 1024)

    @pl.when(nt == 0)
    def _():
        gmax_ref[0] = tile_max

    @pl.when(nt != 0)
    def _():
        gmax_ref[0] = jnp.maximum(gmax_ref[0], tile_max)


def fused_conv_max(x_pad, w1, sh1, w2, sh2, w3, *, tile_n, n_split=1,
                   emit_pointfeat=False):
    """x_pad: (B, N_pad, Cin) bf16; w1: (1 or B, Cin, 64) bf16; w2/w3 bf16; shifts f32.
    Returns partial max (B, n_split, 1024) f32 [, pointfeat (B, 64, N_pad) f32]."""
    B, n_pad, cin = x_pad.shape
    assert n_pad % tile_n == 0
    n_tiles = n_pad // tile_n
    assert n_tiles % n_split == 0
    ntps = n_tiles // n_split
    c1, c2, c3 = w1.shape[-1], w2.shape[-1], w3.shape[-1]

    per_batch_w1 = w1.shape[0] != 1
    w1_map = (lambda b, s, nt: (b, 0, 0)) if per_batch_w1 else (lambda b, s, nt: (0, 0, 0))
    x_map = lambda b, s, nt: (b, s * ntps + nt, 0)

    # Partial-max output laid out as (B*n_split, 1, c3) so the block equals the full last-two dims.
    gmax_spec = pl.BlockSpec((1, 1, c3), lambda b, s, nt: (b * n_split + s, 0, 0))

    if emit_pointfeat:
        out_shape = (jax.ShapeDtypeStruct((B * n_split, 1, c3), jnp.float32),
                     jax.ShapeDtypeStruct((B, c1, n_pad), jnp.float32))
        out_specs = (gmax_spec,
                     pl.BlockSpec((1, c1, tile_n), lambda b, s, nt: (b, 0, s * ntps + nt)))
    else:
        out_shape = jax.ShapeDtypeStruct((B * n_split, 1, c3), jnp.float32)
        out_specs = gmax_spec

    kernel = functools.partial(_fused_conv_max_kernel, emit_pointfeat=emit_pointfeat)

    outs = pl.pallas_call(
        kernel,
        out_shape=out_shape,
        grid=(B, n_split, ntps),
        in_specs=[
            pl.BlockSpec((1, tile_n, cin), x_map),
            pl.BlockSpec((1, cin, c1), w1_map),
            pl.BlockSpec((1, c1), lambda b, s, nt: (0, 0)),
            pl.BlockSpec((c1, c2), lambda b, s, nt: (0, 0)),
            pl.BlockSpec((1, c2), lambda b, s, nt: (0, 0)),
            pl.BlockSpec((c2, c3), lambda b, s, nt: (0, 0)),
        ],
        out_specs=out_specs,
        compiler_params=pltpu.CompilerParams(
            dimension_semantics=("parallel", "parallel", "arbitrary"),
            vmem_limit_bytes=40 * 1024 * 1024),
    )(x_pad, w1, sh1, w2, sh2, w3)

    if emit_pointfeat:
        gmax, pointfeat = outs
        return gmax.reshape(B, n_split, c3), pointfeat
    return outs.reshape(B, n_split, c3)


# -----------------------------------------------------------------------------
# Fused STN head: fc1+bn4+relu -> fc2+bn5+relu -> fc3 (+identity folded into shift)
# -----------------------------------------------------------------------------
def _stn_head_kernel(g_ref, w1_ref, sh1_ref, w2_ref, sh2_ref, w3_ref, sh3_ref, o_ref):
    h = jnp.dot(g_ref[...].astype(jnp.bfloat16), w1_ref[...],
                preferred_element_type=jnp.float32)
    h = jnp.maximum(h + sh1_ref[...], 0.0)
    h = jnp.dot(h.astype(jnp.bfloat16), w2_ref[...], preferred_element_type=jnp.float32)
    h = jnp.maximum(h + sh2_ref[...], 0.0)
    h = jnp.dot(h, w3_ref[...], preferred_element_type=jnp.float32)
    o_ref[...] = h + sh3_ref[...]


def stn_head(g, fc1, fc2, fc3):
    """g: (B, 1024) f32 -> (B, 9) with the 3x3 identity already added."""
    # TODO(synk): tiny latency-bound head; runs as a single grid step on one core.
    (w1, s1, sh1), (w2, s2, sh2), (w3, _, sh3) = fc1, fc2, fc3
    B = g.shape[0]
    w1f = (w1 * s1).astype(jnp.bfloat16)          # fold BN scale, pre-cast to bf16
    w2f = (w2 * s2).astype(jnp.bfloat16)
    sh3_eff = sh3 + jnp.eye(3, dtype=jnp.float32).reshape(1, 9)
    return pl.pallas_call(
        _stn_head_kernel,
        out_shape=jax.ShapeDtypeStruct((B, 9), jnp.float32),
        grid=(1,),
        in_specs=[
            pl.BlockSpec((B, 1024), lambda i: (0, 0)),
            pl.BlockSpec((1024, 512), lambda i: (0, 0)),
            pl.BlockSpec((1, 512), lambda i: (0, 0)),
            pl.BlockSpec((512, 256), lambda i: (0, 0)),
            pl.BlockSpec((1, 256), lambda i: (0, 0)),
            pl.BlockSpec((256, 9), lambda i: (0, 0)),
            pl.BlockSpec((1, 9), lambda i: (0, 0)),
        ],
        out_specs=pl.BlockSpec((B, 9), lambda i: (0, 0)),
    )(g, w1f, sh1, w2f, sh2, w3, sh3_eff)


# -----------------------------------------------------------------------------
# Parameter construction (deterministic, synthetic) + eval-mode BN params
# -----------------------------------------------------------------------------
def _make_layer(key, cin, cout, with_bn=True, eps=1e-5):
    """Returns (W:(cin,cout), scale:(1,cout), shift:(1,cout)) for y = relu?(x@W*scale + shift)."""
    kw, kb, kg, kbe, km = jax.random.split(key, 5)
    w = jax.random.normal(kw, (cin, cout), jnp.float32) * (1.0 / np.sqrt(cin))
    b = 0.01 * jax.random.normal(kb, (cout,), jnp.float32)
    if with_bn:
        gamma = 1.0 + 0.1 * jax.random.normal(kg, (cout,), jnp.float32)
        beta = 0.1 * jax.random.normal(kbe, (cout,), jnp.float32)
        mean = 0.1 * jax.random.normal(km, (cout,), jnp.float32)
        var = jnp.ones((cout,), jnp.float32)
        scale = gamma / jnp.sqrt(var + eps)
        shift = (b - mean) * scale + beta
    else:
        scale = jnp.ones((cout,), jnp.float32)
        shift = b
    return w, scale.reshape(1, cout), shift.reshape(1, cout)


def init_params(key, channel=3):
    keys = jax.random.split(key, 9)
    stn = {
        "conv1": _make_layer(keys[0], channel, 64),
        "conv2": _make_layer(keys[1], 64, 128),
        "conv3": _make_layer(keys[2], 128, 1024),
        "fc1": _make_layer(keys[3], 1024, 512),
        "fc2": _make_layer(keys[4], 512, 256),
        "fc3": _make_layer(keys[5], 256, 9, with_bn=False),
    }
    return {
        "stn": stn,
        "conv1": _make_layer(keys[6], channel, 64),
        "conv2": _make_layer(keys[7], 64, 128),
        "conv3": _make_layer(keys[8], 128, 1024),
    }


# -----------------------------------------------------------------------------
# Model forward (glue in JAX, hot path in Pallas)
# -----------------------------------------------------------------------------
def pointnet_encoder(x, params, global_feat=True, tile_n=None, n_split=None):
    # x: (B, D, N) — PyTorch NCW layout.
    B, D, N = x.shape
    xb = jnp.transpose(x, (0, 2, 1)).astype(jnp.float32)             # (B, N, D)

    d_pad = max(8, _round_up(D, 8))
    tn = _choose_tile_n(N) if tile_n is None else tile_n
    assert tn % 16 == 0
    n_pad = _round_up(N, tn)
    n_tiles = n_pad // tn
    if n_split is None:
        # v7x has 2 TensorCores/chip; for B == 1 split the point-tile reduction so both
        # cores get work, then combine partial maxes with one tiny jnp.max in XLA.
        n_split = 2 if (B == 1 and n_tiles >= 2 and n_tiles % 2 == 0) else 1

    # Pad the points axis by replicating the first (always valid) point: duplicates can
    # never change the max, so the kernel needs no -inf mask. Channel padding stays zero
    # (matching weight rows are zero), then pre-cast to bf16 for the MXU.
    if n_pad > N:
        filler = jnp.broadcast_to(xb[:, :1, :], (B, n_pad - N, D))
        xb = jnp.concatenate([xb, filler], axis=1)
    x_pad = jnp.pad(xb, ((0, 0), (0, 0), (0, d_pad - D))).astype(jnp.bfloat16)

    def fold(layer):   # fold eval-mode BN scale into the weight columns (exact)
        w, s, sh = layer
        return w * s, sh

    # ---------------- STN3d (fused conv chain + max, then fused FC head) ----------------
    sp = params["stn"]
    w1s, sh1s = fold(sp["conv1"])
    w2s, sh2s = fold(sp["conv2"])
    w3s, sh3s = fold(sp["conv3"])
    w1s_pad = jnp.pad(w1s, ((0, d_pad - D), (0, 0)))[None].astype(jnp.bfloat16)
    g_stn_part = fused_conv_max(x_pad, w1s_pad, sh1s,
                                w2s.astype(jnp.bfloat16), sh2s,
                                w3s.astype(jnp.bfloat16),
                                tile_n=tn, n_split=n_split)            # (B, n_split, 1024)
    # conv3 shift and relu hoisted past the max (per-channel add / monotonic relu commute).
    g_stn = jnp.maximum(jnp.max(g_stn_part, axis=1) + sh3s, 0.0)       # (B, 1024)
    trans = stn_head(g_stn, sp["fc1"], sp["fc2"], sp["fc3"]).reshape(B, 3, 3)

    # ------------- encoder: fold the 3x3 transform into conv1 (no bmm kernel) -----------
    w1, sh1 = fold(params["conv1"])
    w2, sh2 = fold(params["conv2"])
    w3, sh3 = fold(params["conv3"])
    w1_pad = jnp.pad(w1, ((0, d_pad - D), (0, 0)))                     # (d_pad, 64)
    w1_xyz = jnp.einsum("bij,jk->bik", trans, w1_pad[:3])              # (B, 3, 64)
    w1_rest = jnp.broadcast_to(w1_pad[3:][None], (B, d_pad - 3, 64))
    w1_eff = jnp.concatenate([w1_xyz, w1_rest], axis=1).astype(jnp.bfloat16)

    outs = fused_conv_max(x_pad, w1_eff, sh1,
                          w2.astype(jnp.bfloat16), sh2,
                          w3.astype(jnp.bfloat16),
                          tile_n=tn, n_split=n_split,
                          emit_pointfeat=not global_feat)

    if global_feat:
        g = jnp.max(outs, axis=1) + sh3                                # shift hoisted past max
        return g, trans, None

    g_part, pointfeat = outs
    g = jnp.max(g_part, axis=1) + sh3                                  # (B, 1024)
    pointfeat = pointfeat[:, :, :N]                                    # (B, 64, N) channel-major
    g_tiled = jnp.broadcast_to(g[:, :, None], (B, g.shape[1], N))
    out = jnp.concatenate([g_tiled, pointfeat], axis=1)                # (B, 1088, N)
    return out, trans, None


# -----------------------------------------------------------------------------
# NumPy reference (pure f32, unfused, explicit bmm) for a sanity check
# -----------------------------------------------------------------------------
def reference_forward(x_np, params, global_feat=True):
    p = jax.tree_util.tree_map(np.asarray, params)

    def pw(h, layer, relu):
        w, s, sh = layer
        y = h @ w * s + sh
        return np.maximum(y, 0.0) if relu else y

    B, D, N = x_np.shape
    xb = np.transpose(x_np, (0, 2, 1)).astype(np.float32)
    h = pw(xb, p["stn"]["conv1"], True)
    h = pw(h, p["stn"]["conv2"], True)
    h = pw(h, p["stn"]["conv3"], True)
    g = h.max(axis=1)
    g = pw(g, p["stn"]["fc1"], True)
    g = pw(g, p["stn"]["fc2"], True)
    g = pw(g, p["stn"]["fc3"], False)
    trans = (g + np.eye(3, dtype=np.float32).reshape(1, 9)).reshape(B, 3, 3)

    xyz = xb if D <= 3 else xb[:, :, :3]
    xt = np.matmul(xyz, trans)
    if D > 3:
        xt = np.concatenate([xt, xb[:, :, 3:]], axis=2)
    h1 = pw(xt, p["conv1"], True)
    h = pw(h1, p["conv2"], True)
    h = pw(h, p["conv3"], False)
    gmax = h.max(axis=1)
    if global_feat:
        return gmax, trans
    gl = np.broadcast_to(gmax[:, None, :], (B, N, gmax.shape[1]))
    out = np.transpose(np.concatenate([gl, h1], axis=2), (0, 2, 1))
    return out, trans


# -----------------------------------------------------------------------------
if __name__ == "__main__":
    key = jax.random.PRNGKey(0)
    kx1, kx2, kx4, kp = jax.random.split(key, 4)

    B, channel = 2, 3
    params = init_params(kp, channel=channel)

    # bf16 MXU operands inside the kernels vs a pure-f32 NumPy reference -> loose tolerance.
    RTOL, ATOL = 1e-1, 1e-1

    # --- test 1: single N tile (N=16), global feature path -------------------------------
    N1 = 16
    x1 = jax.random.normal(kx1, (B, channel, N1), dtype=jnp.float32)
    gfeat, trans, trans_feat = pointnet_encoder(x1, params, global_feat=True)
    gfeat = jax.block_until_ready(gfeat)
    trans = jax.block_until_ready(trans)
    assert gfeat.shape == (B, 1024) and gfeat.dtype == jnp.float32
    assert trans.shape == (B, 3, 3) and trans_feat is None
    assert bool(jnp.all(jnp.isfinite(gfeat))) and bool(jnp.all(jnp.isfinite(trans)))
    ref_g, ref_t = reference_forward(np.asarray(x1), params)
    np.testing.assert_allclose(np.asarray(trans), ref_t, rtol=RTOL, atol=ATOL)
    np.testing.assert_allclose(np.asarray(gfeat), ref_g, rtol=RTOL, atol=ATOL)

    # --- test 2: multi-tile reduction + duplicate-point padding (N=24, TN=16 -> 2 tiles) --
    N2 = 24
    x2 = jax.random.normal(kx2, (B, channel, N2), dtype=jnp.float32)
    gfeat2, trans2, _ = pointnet_encoder(x2, params, global_feat=True, tile_n=16)
    gfeat2 = jax.block_until_ready(gfeat2)
    ref_g2, ref_t2 = reference_forward(np.asarray(x2), params)
    np.testing.assert_allclose(np.asarray(trans2), ref_t2, rtol=RTOL, atol=ATOL)
    np.testing.assert_allclose(np.asarray(gfeat2), ref_g2, rtol=RTOL, atol=ATOL)

    # --- test 3: per-point feature path (global_feat=False, channel-major pointfeat) -----
    out3, trans3, _ = pointnet_encoder(x1, params, global_feat=False)
    out3 = jax.block_until_ready(out3)
    assert out3.shape == (B, 1024 + 64, N1)
    ref_o3, _ = reference_forward(np.asarray(x1), params, global_feat=False)
    np.testing.assert_allclose(np.asarray(out3), ref_o3, rtol=RTOL, atol=ATOL)

    # --- test 4: B=1 dual-core split (N=64, TN=16 -> 4 tiles, n_split=2) ------------------
    N4 = 64
    x4 = jax.random.normal(kx4, (1, channel, N4), dtype=jnp.float32)
    gfeat4, trans4, _ = pointnet_encoder(x4, params, global_feat=True, tile_n=16)
    gfeat4 = jax.block_until_ready(gfeat4)
    ref_g4, ref_t4 = reference_forward(np.asarray(x4), params)
    np.testing.assert_allclose(np.asarray(trans4), ref_t4, rtol=RTOL, atol=ATOL)
    np.testing.assert_allclose(np.asarray(gfeat4), ref_g4, rtol=RTOL, atol=ATOL)

    print("KERNEL_OK")
</pallas_src>

<mosaic_0001>
module attributes {stable_mosaic.version = 11 : i64} {
  func.func @_fused_conv_max_kernel(%arg0: i32, %arg1: i32, %arg2: i32, %arg3: memref<1x16x8xbf16, #tpu.memory_space<vmem>>, %arg4: memref<1x8x64xbf16, #tpu.memory_space<vmem>>, %arg5: memref<1x64xf32, #tpu.memory_space<vmem>>, %arg6: memref<64x128xbf16, #tpu.memory_space<vmem>>, %arg7: memref<1x128xf32, #tpu.memory_space<vmem>>, %arg8: memref<128x1024xbf16, #tpu.memory_space<vmem>>, %arg9: memref<1x1x1024xf32, #tpu.memory_space<vmem>>) attributes {dimension_semantics = [#tpu.dimension_semantics<parallel>, #tpu.dimension_semantics<parallel>, #tpu.dimension_semantics<arbitrary>], iteration_bounds = array<i64: 2, 1, 1>, scalar_prefetch = 0 : i64, scratch_operands = 0 : i64, tpu.core_type = #tpu.core_type<tc>, window_params = [{transform_indices = @transform_0, window_bounds = array<i64: 1, 16, 8>}, {pipeline_mode = #tpu.pipeline_mode<synchronous>, transform_indices = @transform_1, window_bounds = array<i64: 1, 8, 64>}, {pipeline_mode = #tpu.pipeline_mode<synchronous>, transform_indices = @transform_2, window_bounds = array<i64: 1, 64>}, {pipeline_mode = #tpu.pipeline_mode<synchronous>, transform_indices = @transform_3, window_bounds = array<i64: 64, 128>}, {pipeline_mode = #tpu.pipeline_mode<synchronous>, transform_indices = @transform_4, window_bounds = array<i64: 1, 128>}, {pipeline_mode = #tpu.pipeline_mode<synchronous>, transform_indices = @transform_5, window_bounds = array<i64: 128, 1024>}, {transform_indices = @transform_6, window_bounds = array<i64: 1, 1, 1024>}]} {
    %c0 = arith.constant 0 : index
    %c0_0 = arith.constant 0 : index
    %c0_1 = arith.constant 0 : index
    %0 = vector.load %arg3[%c0, %c0_0, %c0_1] : memref<1x16x8xbf16, #tpu.memory_space<vmem>>, vector<1x16x8xbf16>
    %1 = vector.shape_cast %0 : vector<1x16x8xbf16> to vector<16x8xbf16>
    %c0_2 = arith.constant 0 : index
    %c0_3 = arith.constant 0 : index
    %c0_4 = arith.constant 0 : index
    %2 = vector.load %arg4[%c0_2, %c0_3, %c0_4] : memref<1x8x64xbf16, #tpu.memory_space<vmem>>, vector<1x8x64xbf16>
    %3 = vector.shape_cast %2 : vector<1x8x64xbf16> to vector<8x64xbf16>
    %cst = arith.constant dense<0.000000e+00> : vector<16x64xf32>
    %4 = tpu.matmul %1, %3, %cst {dimension_numbers = #tpu.dot_dimension_numbers<[1], [0], [0], [1], [0, 0, 1, 1], [], []>} : vector<16x8xbf16>, vector<8x64xbf16>, vector<16x64xf32> -> vector<16x64xf32>
    %c0_5 = arith.constant 0 : index
    %c0_6 = arith.constant 0 : index
    %5 = vector.load %arg5[%c0_5, %c0_6] : memref<1x64xf32, #tpu.memory_space<vmem>>, vector<1x64xf32>
    %6 = vector.broadcast %5 : vector<1x64xf32> to vector<16x64xf32>
    %7 = arith.addf %4, %6 : vector<16x64xf32>
    %cst_7 = arith.constant 0.000000e+00 : f32
    %8 = vector.broadcast %cst_7 : f32 to vector<16x64xf32>
    %9 = arith.maximumf %7, %8 : vector<16x64xf32>
    %10 = arith.truncf %9 : vector<16x64xf32> to vector<16x64xbf16>
    %c0_8 = arith.constant 0 : index
    %c0_9 = arith.constant 0 : index
    %11 = vector.load %arg6[%c0_8, %c0_9] : memref<64x128xbf16, #tpu.memory_space<vmem>>, vector<64x128xbf16>
    %cst_10 = arith.constant dense<0.000000e+00> : vector<16x128xf32>
    %12 = tpu.matmul %10, %11, %cst_10 {dimension_numbers = #tpu.dot_dimension_numbers<[1], [0], [0], [1], [0, 0, 1, 1], [], []>} : vector<16x64xbf16>, vector<64x128xbf16>, vector<16x128xf32> -> vector<16x128xf32>
    %c0_11 = arith.constant 0 : index
    %c0_12 = arith.constant 0 : index
    %13 = vector.load %arg7[%c0_11, %c0_12] : memref<1x128xf32, #tpu.memory_space<vmem>>, vector<1x128xf32>
    %14 = vector.broadcast %13 : vector<1x128xf32> to vector<16x128xf32>
    %15 = arith.addf %12, %14 : vector<16x128xf32>
    %cst_13 = arith.constant 0.000000e+00 : f32
    %16 = vector.broadcast %cst_13 : f32 to vector<16x128xf32>
    %17 = arith.maximumf %15, %16 : vector<16x128xf32>
    %18 = arith.truncf %17 : vector<16x128xf32> to vector<16x128xbf16>
    %c0_14 = arith.constant 0 : index
    %c0_15 = arith.constant 0 : index
    %19 = vector.load %arg8[%c0_14, %c0_15] : memref<128x1024xbf16, #tpu.memory_space<vmem>>, vector<128x1024xbf16>
    %cst_16 = arith.constant dense<0.000000e+00> : vector<16x1024xf32>
    %20 = tpu.matmul %18, %19, %cst_16 {dimension_numbers = #tpu.dot_dimension_numbers<[1], [0], [0], [1], [0, 0, 1, 1], [], []>} : vector<16x128xbf16>, vector<128x1024xbf16>, vector<16x1024xf32> -> vector<16x1024xf32>
    %cst_17 = arith.constant dense<0xFF800000> : vector<1024xf32>
    %21 = vector.multi_reduction <maximumf>, %20, %cst_17 [0] : vector<16x1024xf32> to vector<1024xf32>
    %22 = vector.shape_cast %21 : vector<1024xf32> to vector<1x1024xf32>
    %c0_i32 = arith.constant 0 : i32
    %23 = arith.cmpi eq, %arg2, %c0_i32 : i32
    %24 = arith.extui %23 : i1 to i32
    %c0_i32_18 = arith.constant 0 : i32
    %25 = arith.cmpi ne, %24, %c0_i32_18 : i32
    scf.if %25 {
      %c0_21 = arith.constant 0 : index
      %c0_22 = arith.constant 0 : index
      %c0_23 = arith.constant 0 : index
      %29 = vector.load %arg9[%c0_21, %c0_22, %c0_23] : memref<1x1x1024xf32, #tpu.memory_space<vmem>>, vector<1x1x1024xf32>
      %30 = vector.shape_cast %29 : vector<1x1x1024xf32> to vector<1x1024xf32>
      %31 = vector.shape_cast %22 : vector<1x1024xf32> to vector<1x1x1024xf32>
      tpu.vector_store %arg9[%c0_21, %c0_22, %c0_23], %31 {strides = array<i32>} : memref<1x1x1024xf32, #tpu.memory_space<vmem>>, vector<1x1x1024xf32>,
    } else {
    }
    %c0_i32_19 = arith.constant 0 : i32
    %26 = arith.cmpi ne, %arg2, %c0_i32_19 : i32
    %27 = arith.extui %26 : i1 to i32
    %c0_i32_20 = arith.constant 0 : i32
    %28 = arith.cmpi ne, %27, %c0_i32_20 : i32
    scf.if %28 {
      %c0_21 = arith.constant 0 : index
      %c0_22 = arith.constant 0 : index
      %c0_23 = arith.constant 0 : index
      %29 = vector.load %arg9[%c0_21, %c0_22, %c0_23] : memref<1x1x1024xf32, #tpu.memory_space<vmem>>, vector<1x1x1024xf32>
      %30 = vector.shape_cast %29 : vector<1x1x1024xf32> to vector<1x1024xf32>
      %31 = arith.maximumf %30, %22 : vector<1x1024xf32>
      %c0_24 = arith.constant 0 : index
      %c0_25 = arith.constant 0 : index
      %c0_26 = arith.constant 0 : index
      %32 = vector.load %arg9[%c0_24, %c0_25, %c0_26] : memref<1x1x1024xf32, #tpu.memory_space<vmem>>, vector<1x1x1024xf32>
      %33 = vector.shape_cast %32 : vector<1x1x1024xf32> to vector<1x1024xf32>
      %34 = vector.shape_cast %31 : vector<1x1024xf32> to vector<1x1x1024xf32>
      tpu.vector_store %arg9[%c0_24, %c0_25, %c0_26], %34 {strides = array<i32>} : memref<1x1x1024xf32, #tpu.memory_space<vmem>>, vector<1x1x1024xf32>,
    } else {
    }
    return
  }
  func.func @transform_0(%arg0: i32, %arg1: i32, %arg2: i32) -> (i32, i32, i32) {
    %c1_i32 = arith.constant 1 : i32
    %0 = arith.muli %arg1, %c1_i32 : i32
    %1 = arith.addi %0, %arg2 : i32
    %c0_i32 = arith.constant 0 : i32
    %c0_i32_0 = arith.constant 0 : i32
    return %arg0, %1, %c0_i32 : i32, i32, i32
  }
  func.func @transform_1(%arg0: i32, %arg1: i32, %arg2: i32) -> (i32, i32, i32) {
    %c0_i32 = arith.constant 0 : i32
    %c0_i32_0 = arith.constant 0 : i32
    %c0_i32_1 = arith.constant 0 : i32
    %c0_i32_2 = arith.constant 0 : i32
    return %c0_i32, %c0_i32_0, %c0_i32_1 : i32, i32, i32
  }
  func.func @transform_2(%arg0: i32, %arg1: i32, %arg2: i32) -> (i32, i32) {
    %c0_i32 = arith.constant 0 : i32
    %c0_i32_0 = arith.constant 0 : i32
    %c0_i32_1 = arith.constant 0 : i32
    return %c0_i32, %c0_i32_0 : i32, i32
  }
  func.func @transform_3(%arg0: i32, %arg1: i32, %arg2: i32) -> (i32, i32) {
    %c0_i32 = arith.constant 0 : i32
    %c0_i32_0 = arith.constant 0 : i32
    %c0_i32_1 = arith.constant 0 : i32
    return %c0_i32, %c0_i32_0 : i32, i32
  }
  func.func @transform_4(%arg0: i32, %arg1: i32, %arg2: i32) -> (i32, i32) {
    %c0_i32 = arith.constant 0 : i32
    %c0_i32_0 = arith.constant 0 : i32
    %c0_i32_1 = arith.constant 0 : i32
    return %c0_i32, %c0_i32_0 : i32, i32
  }
  func.func @transform_5(%arg0: i32, %arg1: i32, %arg2: i32) -> (i32, i32) {
    %c0_i32 = arith.constant 0 : i32
    %c0_i32_0 = arith.constant 0 : i32
    %c0_i32_1 = arith.constant 0 : i32
    return %c0_i32, %c0_i32_0 : i32, i32
  }
  func.func @transform_6(%arg0: i32, %arg1: i32, %arg2: i32) -> (i32, i32, i32) {
    %c1_i32 = arith.constant 1 : i32
    %0 = arith.muli %arg0, %c1_i32 : i32
    %1 = arith.addi %0, %arg1 : i32
    %c0_i32 = arith.constant 0 : i32
    %c0_i32_0 = arith.constant 0 : i32
    %c0_i32_1 = arith.constant 0 : i32
    return %1, %c0_i32, %c0_i32_0 : i32, i32, i32
  }
}

</mosaic_0001>

<llo_original>
// kernel: tpu_custom_call.1
$region0: #{tpu_custom_call.1}
  #allocation0 [shape = 'u32[]', space=smem, size = 0x4, offset = 0x4, fixed_abs, tag = 'smem constant byte address 0x4 - core index']
  #allocation1 [shape = 'u32[144,128]{1,0:T(1,128)}', space=vmem, size = 0x12000, scoped, tag = 'internal scratch']
  %s0 = inlined_call_operand.vmem [shape: bf16[2,16,8], index: 0, kind: input, shape index: {}]
  %s1 = inlined_call_operand.hbm [shape: bf16[1,8,64], index: 1, kind: input, shape index: {}]
  %s2 = inlined_call_operand.vmem [shape: f32[1,64], index: 2, kind: input, shape index: {}]
  %s3 = inlined_call_operand.vmem [shape: bf16[64,128], index: 3, kind: input, shape index: {}]
  %s4 = inlined_call_operand.vmem [shape: f32[1,128], index: 4, kind: input, shape index: {}]
  %s5 = inlined_call_operand.hbm [shape: bf16[128,1024], index: 5, kind: input, shape index: {}]
  %s6 = inlined_call_operand.hbm [shape: f32[2,1,1024], index: 6, kind: output, shape index: {}]
  %s7 = sld [smem:[#allocation0]]
  $region73: #{tpu_custom_call.1} parent=0
    _
  %s9 = ssub.s32 1, %s7
  %s10 = scalar_select 0, %s9, %s7
  $region1: #{tpu_custom_call.1} parent=0
    #allocation2 [shape = 'u8[2048]{0}', space=vmem, size = 0x800, scoped, tag = 'input window, operand 1, single buffered']
    #allocation3 [shape = 's32[2]{0}', space=sflag, size = 0x8, scoped, tag = 'scoped memory for tpu_custom_call.1']
    #allocation4 [shape = 's32[2]{0}', space=sflag, size = 0x8, scoped, tag = 'scoped memory for tpu_custom_call.1']
    #allocation5 [shape = 'u8[262144]{0}', space=vmem, size = 0x40000, scoped, tag = 'input window, operand 5, single buffered']
    #allocation6 [shape = 's32[1]{0}', space=sflag, size = 0x4, scoped, tag = 'scoped memory for tpu_custom_call.1']
    #allocation7 [shape = 'u8[8192]{0}', space=vmem, size = 0x2000, scoped, tag = 'output window, operand 0']
    %11 = vsyncpa [#allocation3], 0
    %12 = vsyncpa [#allocation6], 0
    %13 = vsyncpa [#allocation4], 0
    %s14 = scalar_lea.sflag [#allocation4], 1
    %15 = vsyncpa %s14, 0
    loop: start=0, step=1, limit=4
    $region2: #{tpu_custom_call.1} parent=1 // loop_pre_header
      _
    $region3: #{tpu_custom_call.1} parent=1 // loop_header
      %s17 = sphi 0, %s21
      %p18 = scmp.ge.s32.totalorder %s17, 4
      %s24 = sphi 0, %s43
      %s25 = sphi 0, %s39
      %s26 = sphi 0, %s35
      %s27 = sphi 0, %s24
      %s28 = sphi 0, %s25
      %s29 = sphi 0, %s26
      %s30 = sphi 0, %s27
      %s31 = sphi 0, %s28
      %s32 = sphi 0, %s29
      %s50 = sphi 0, %s52
      %s53 = sphi 0, %s50
      %s54 = sphi 0, %s53
      %s70 = sphi 0, %s54
      %s74 = sphi 0, %s74
      %s76 = sphi 0, %s74
      %s77 = sphi 0, %s76
      %s91 = sphi 0, %s77
      %s95 = sphi 0, %s95
      %s97 = sphi 0, %s95
      %s98 = sphi 0, %s97
      %s112 = sphi 0, %s98
      %s116 = sphi 0, %s116
      %s118 = sphi 0, %s116
      %s119 = sphi 0, %s118
      %s133 = sphi 0, %s119
      %s137 = sphi 0, %s137
      %s139 = sphi 0, %s137
      %s140 = sphi 0, %s139
      %s154 = sphi 0, %s140
      %s158 = sphi 0, %s158
      %s160 = sphi 0, %s158
      %s161 = sphi 0, %s160
      %s175 = sphi 0, %s161
      %s183 = sphi 0, %s185
      %s186 = sphi 0, %s183
      %s187 = sphi 0, %s186
      %s203 = sphi 0, %s187
    $region4: #{tpu_custom_call.1} parent=1 // loop_header_branch
      %20 = sbr.rel (%p18) target = $region8
    $region5: #{tpu_custom_call.1} parent=1 // loop_body
      %s22 = ssub.s32 %s17, 1
      %s23 = ssub.s32 %s17, 2
      %s33 = sadd.s32 1, %s26
      %p34 = scmp.ge.s32.totalorder %s33, 1
      %s35 = scalar_select %p34, 0, %s33
      %s36 = sadd.s32 1, %s25
      %s37 = scalar_select %p34, %s36, %s25
      %p38 = scmp.ge.s32.totalorder %s37, 1
      %s39 = scalar_select %p38, 0, %s37
      %s40 = sadd.s32 1, %s24
      %s41 = scalar_select %p38, %s40, %s24
      %p42 = scmp.ge.s32.totalorder %s41, 2
      %s43 = scalar_select %p42, 0, %s41
      %s44 = sadd.s32 %s25, %s26
      %s45 = sadd.s32 %s39, %s35
      %s46 = ssub.s32 %s24, %s43
      %s47 = ssub.s32 %s44, %s45
      %s48 = sor.u32 %s46, %s47
      %p49 = scmp.eq.s32.totalorder %s48, 0
      %s51 = sadd.s32 %s50, 1
      %s52 = scalar_select %p49, %s50, %s51
      %p55 = pneg %p49
      %p56 = scmp.eq.s32.totalorder %s17, 1
      %p57 = por %p55, %p56
      %p58 = scmp.ne.s32.totalorder %s50, %s53
      %p59 = scmp.eq.s32.totalorder %s17, 0
      %p60 = por %p58, %p59
      %p61 = scmp.ne.s32.totalorder %s50, %s53
      %p62 = scmp.eq.s32.totalorder %s22, 1
      %p63 = por %p61, %p62
      %p64 = scmp.ne.s32.totalorder %s53, %s54
      %p65 = scmp.eq.s32.totalorder %s22, 0
      %p66 = por %p64, %p65
      %p67 = scmp.ne.s32.totalorder %s53, %s54
      %p68 = scmp.eq.s32.totalorder %s23, 1
      %p69 = por %p67, %p68
      %p71 = scmp.ne.s32.totalorder %s54, %s70
      %p72 = scmp.eq.s32.totalorder %s23, 0
      %p73 = por %p71, %p72
      %s75 = sadd.s32 %s74, 1
      %p78 = scmp.eq.s32.totalorder %s17, 1
      %p79 = scmp.ne.s32.totalorder %s74, %s76
      %p80 = scmp.eq.s32.totalorder %s17, 0
      %p81 = por %p79, %p80
      %p82 = scmp.ne.s32.totalorder %s74, %s76
      %p83 = scmp.eq.s32.totalorder %s22, 1
      %p84 = por %p82, %p83
      %p85 = scmp.ne.s32.totalorder %s76, %s77
      %p86 = scmp.eq.s32.totalorder %s22, 0
      %p87 = por %p85, %p86
      %p88 = scmp.ne.s32.totalorder %s76, %s77
      %p89 = scmp.eq.s32.totalorder %s23, 1
      %p90 = por %p88, %p89
      %p92 = scmp.ne.s32.totalorder %s77, %s91
      %p93 = scmp.eq.s32.totalorder %s23, 0
      %p94 = por %p92, %p93
      %s96 = sadd.s32 %s95, 1
      %p99 = scmp.eq.s32.totalorder %s17, 1
      %p100 = scmp.ne.s32.totalorder %s95, %s97
      %p101 = scmp.eq.s32.totalorder %s17, 0
      %p102 = por %p100, %p101
      %p103 = scmp.ne.s32.totalorder %s95, %s97
      %p104 = scmp.eq.s32.totalorder %s22, 1
      %p105 = por %p103, %p104
      %p106 = scmp.ne.s32.totalorder %s97, %s98
      %p107 = scmp.eq.s32.totalorder %s22, 0
      %p108 = por %p106, %p107
      %p109 = scmp.ne.s32.totalorder %s97, %s98
      %p110 = scmp.eq.s32.totalorder %s23, 1
      %p111 = por %p109, %p110
      %p113 = scmp.ne.s32.totalorder %s98, %s112
      %p114 = scmp.eq.s32.totalorder %s23, 0
      %p115 = por %p113, %p114
      %s117 = sadd.s32 %s116, 1
      %p120 = scmp.eq.s32.totalorder %s17, 1
      %p121 = scmp.ne.s32.totalorder %s116, %s118
      %p122 = scmp.eq.s32.totalorder %s17, 0
      %p123 = por %p121, %p122
      %p124 = scmp.ne.s32.totalorder %s116, %s118
      %p125 = scmp.eq.s32.totalorder %s22, 1
      %p126 = por %p124, %p125
      %p127 = scmp.ne.s32.totalorder %s118, %s119
      %p128 = scmp.eq.s32.totalorder %s22, 0
      %p129 = por %p127, %p128
      %p130 = scmp.ne.s32.totalorder %s118, %s119
      %p131 = scmp.eq.s32.totalorder %s23, 1
      %p132 = por %p130, %p131
      %p134 = scmp.ne.s32.totalorder %s119, %s133
      %p135 = scmp.eq.s32.totalorder %s23, 0
      %p136 = por %p134, %p135
      %s138 = sadd.s32 %s137, 1
      %p141 = scmp.eq.s32.totalorder %s17, 1
      %p142 = scmp.ne.s32.totalorder %s137, %s139
      %p143 = scmp.eq.s32.totalorder %s17, 0
      %p144 = por %p142, %p143
      %p145 = scmp.ne.s32.totalorder %s137, %s139
      %p146 = scmp.eq.s32.totalorder %s22, 1
      %p147 = por %p145, %p146
      %p148 = scmp.ne.s32.totalorder %s139, %s140
      %p149 = scmp.eq.s32.totalorder %s22, 0
      %p150 = por %p148, %p149
      %p151 = scmp.ne.s32.totalorder %s139, %s140
      %p152 = scmp.eq.s32.totalorder %s23, 1
      %p153 = por %p151, %p152
      %p155 = scmp.ne.s32.totalorder %s140, %s154
      %p156 = scmp.eq.s32.totalorder %s23, 0
      %p157 = por %p155, %p156
      %s159 = sadd.s32 %s158, 1
      %p162 = scmp.eq.s32.totalorder %s17, 1
      %p163 = scmp.ne.s32.totalorder %s158, %s160
      %p164 = scmp.eq.s32.totalorder %s17, 0
      %p165 = por %p163, %p164
      %p166 = scmp.ne.s32.totalorder %s158, %s160
      %p167 = scmp.eq.s32.totalorder %s22, 1
      %p168 = por %p166, %p167
      %p169 = scmp.ne.s32.totalorder %s160, %s161
      %p170 = scmp.eq.s32.totalorder %s22, 0
      %p171 = por %p169, %p170
      %p172 = scmp.ne.s32.totalorder %s160, %s161
      %p173 = scmp.eq.s32.totalorder %s23, 1
      %p174 = por %p172, %p173
      %p176 = scmp.ne.s32.totalorder %s161, %s175
      %p177 = scmp.eq.s32.totalorder %s23, 0
      %p178 = por %p176, %p177
      %s179 = sadd.s32 %s24, %s25
      %s180 = sadd.s32 %s43, %s39
      %s181 = ssub.s32 %s179, %s180
      %p182 = scmp.eq.s32.totalorder %s181, 0
      %s184 = sadd.s32 %s183, 1
      %s185 = scalar_select %p182, %s183, %s184
      %p188 = pneg %p182
      %p189 = scmp.eq.s32.totalorder %s17, 1
      %p190 = por %p188, %p189
      %p191 = scmp.ne.s32.totalorder %s183, %s186
      %p192 = scmp.eq.s32.totalorder %s17, 0
      %p193 = por %p191, %p192
      %p194 = scmp.ne.s32.totalorder %s183, %s186
      %p195 = scmp.eq.s32.totalorder %s22, 1
      %p196 = por %p194, %p195
      %p197 = scmp.ne.s32.totalorder %s186, %s187
      %p198 = scmp.eq.s32.totalorder %s22, 0
      %p199 = por %p197, %p198
      %p200 = scmp.ne.s32.totalorder %s186, %s187
      %p201 = scmp.eq.s32.totalorder %s23, 1
      %p202 = por %p200, %p201
      %p204 = scmp.ne.s32.totalorder %s187, %s203
      %p205 = scmp.eq.s32.totalorder %s23, 0
      %p206 = por %p204, %p205
      %p207 = scmp.le.s32.totalorder 1, %s17
      %p208 = scmp.lt.s32.totalorder %s17, 3
      %p209 = pnand %p207, %p208
      %p210 = pneg %p209
      // Predicated region
      $region9: #{tpu_custom_call.1} parent=5 // pred_check
        _
      $region10: #{tpu_custom_call.1} parent=5 // pred_check_branch
        %212 = sbr.rel (%p209) target = $region12
      $region11: #{tpu_custom_call.1} parent=5 // pred_region
        %s213 = ssub.s32 %s17, 1
        // Predicated region
        $region13: #{tpu_custom_call.1} parent=11 // pred_check
          %p214 = pneg %p87
        $region14: #{tpu_custom_call.1} parent=11 // pred_check_branch
          %216 = sbr.rel (%p214) target = $region16
        $region15: #{tpu_custom_call.1} parent=11 // pred_region
          %s218 = ssub.s32 64, 64
          %219 = vsyncadd [#allocation3], %s218
          %s221 = sshll.u32 [#allocation2], 4
          %s222 = int_to_ptr.vmem [resolvable:$true] %s221
          %224 = dma.hbm_to_vmem [thread:$0]  %s1, 64, %s222, [#allocation3]
        $region16: #{tpu_custom_call.1} parent=11 // pred_fallthru
          _
        // Predicated region
        $region17: #{tpu_custom_call.1} parent=11 // pred_check
          %p225 = pneg %p108
        $region18: #{tpu_custom_call.1} parent=11 // pred_check_branch
          %227 = sbr.rel (%p225) target = $region20
        $region19: #{tpu_custom_call.1} parent=11 // pred_region
          _
        $region20: #{tpu_custom_call.1} parent=11 // pred_fallthru
          _
        // Predicated region
        $region21: #{tpu_custom_call.1} parent=11 // pred_check
          %p228 = pneg %p129
        $region22: #{tpu_custom_call.1} parent=11 // pred_check_branch
          %230 = sbr.rel (%p228) target = $region24
        $region23: #{tpu_custom_call.1} parent=11 // pred_region
          _
        $region24: #{tpu_custom_call.1} parent=11 // pred_fallthru
          _
        // Predicated region
        $region25: #{tpu_custom_call.1} parent=11 // pred_check
          %p231 = pneg %p150
        $region26: #{tpu_custom_call.1} parent=11 // pred_check_branch
          %233 = sbr.rel (%p231) target = $region28
        $region27: #{tpu_custom_call.1} parent=11 // pred_region
          _
        $region28: #{tpu_custom_call.1} parent=11 // pred_fallthru
          _
        // Predicated region
        $region29: #{tpu_custom_call.1} parent=11 // pred_check
          %p234 = pneg %p171
        $region30: #{tpu_custom_call.1} parent=11 // pred_check_branch
          %236 = sbr.rel (%p234) target = $region32
        $region31: #{tpu_custom_call.1} parent=11 // pred_region
          %s238 = ssub.s32 8192, 8192
          %239 = vsyncadd [#allocation6], %s238
          %s240 = sshll.u32 [#allocation5], 4
          %s241 = int_to_ptr.vmem [resolvable:$true] %s240
          %246 = dma.hbm_to_vmem [thread:$0]  %s5, 8192, %s241, [#allocation6], 512, 512, 32
        $region32: #{tpu_custom_call.1} parent=11 // pred_fallthru
          _
      $region12: #{tpu_custom_call.1} parent=5 // pred_fallthru
        _
      %p247 = scmp.lt.s32.totalorder %s17, 2
      // Predicated region
      $region33: #{tpu_custom_call.1} parent=5 // pred_check
        %p248 = pneg %p247
      $region34: #{tpu_custom_call.1} parent=5 // pred_check_branch
        %250 = sbr.rel (%p248) target = $region36
      $region35: #{tpu_custom_call.1} parent=5 // pred_region
        // Predicated region
        $region37: #{tpu_custom_call.1} parent=35 // pred_check
          %p251 = pneg %p60
        $region38: #{tpu_custom_call.1} parent=35 // pred_check_branch
          %253 = sbr.rel (%p251) target = $region40
        $region39: #{tpu_custom_call.1} parent=35 // pred_region
          %s254 = sadd.s32 %s25, %s26
          %s255 = smul.u32 2, %s254
          %p256 = scmp.lt.s32.totalorder %s24, 1
          %s257 = scalar_select %p256, %s24, 1
          %p258 = scmp.lt.s32.totalorder %s255, 1
          %s259 = scalar_select %p258, %s255, 1
          %s260 = smul.addr %s257, 2
          %s261 = sadd.s32 %s259, %s260
          %s262 = smul.addr %s261, 4
          %s263 = scalar_lea.vmem %s0, %s262
          %s264 = sadd.s32 %s25, %s26
          %s265 = smul.u32 2, %s264
        $region40: #{tpu_custom_call.1} parent=35 // pred_fallthru
          _
      $region36: #{tpu_custom_call.1} parent=5 // pred_fallthru
        _
      %p266 = scmp.le.s32.totalorder 1, %s17
      %p267 = scmp.lt.s32.totalorder %s17, 3
      %p268 = pnand %p266, %p267
      %p269 = pneg %p268
      // Predicated region
      $region41: #{tpu_custom_call.1} parent=5 // pred_check
        _
      $region42: #{tpu_custom_call.1} parent=5 // pred_check_branch
        %271 = sbr.rel (%p268) target = $region44
      $region43: #{tpu_custom_call.1} parent=5 // pred_region
        %s272 = ssub.s32 %s17, 1
        // Predicated region
        $region45: #{tpu_custom_call.1} parent=43 // pred_check
          %p273 = pneg %p87
        $region46: #{tpu_custom_call.1} parent=43 // pred_check_branch
          %275 = sbr.rel (%p273) target = $region48
        $region47: #{tpu_custom_call.1} parent=43 // pred_region
          %276 = dma.done [#allocation3], 64
        $region48: #{tpu_custom_call.1} parent=43 // pred_fallthru
          _
        // Predicated region
        $region49: #{tpu_custom_call.1} parent=43 // pred_check
          %p277 = pneg %p171
        $region50: #{tpu_custom_call.1} parent=43 // pred_check_branch
          %279 = sbr.rel (%p277) target = $region52
        $region51: #{tpu_custom_call.1} parent=43 // pred_region
          %280 = dma.done [#allocation6], 8192
        $region52: #{tpu_custom_call.1} parent=43 // pred_fallthru
          _
        %s281 = sadd.s32 %s28, %s29
        %s282 = smul.u32 2, %s281
        %p283 = scmp.lt.s32.totalorder %s27, 1
        %s284 = scalar_select %p283, %s27, 1
        %p285 = scmp.lt.s32.totalorder %s282, 1
        %s286 = scalar_select %p285, %s282, 1
        %s287 = smul.addr %s284, 2
        %s288 = sadd.s32 %s286, %s287
        %s289 = smul.addr %s288, 4
        %s290 = scalar_lea.vmem %s0, %s289
        %p291 = pneg %p66
        %p292 = pneg %p63
        %p293 = pneg %p87
        %p294 = pneg %p84
        %p295 = pneg %p108
        %p296 = pneg %p105
        %p297 = pneg %p129
        %p298 = pneg %p126
        %p299 = pneg %p150
        %p300 = pneg %p147
        %p301 = pneg %p171
        %p302 = pneg %p168
        %p303 = pneg %p199
        %p304 = pneg %p196
        %s305 = sand.u32 %s186, 1
        %s306 = scalar_lea.sflag [#allocation4], %s305
        %s307 = sand.u32 %s186, 1
        %s308 = smul.addr %s307, 8
        %s309 = scalar_lea.vmem [#allocation7], %s308
        %s310 = sadd.s32 %s28, %s29
        %s311 = smul.u32 2, %s310
        %p312 = scmp.lt.s32.totalorder %s27, 1
        %s313 = scalar_select %p312, %s27, 1
        %p314 = scmp.lt.s32.totalorder %s311, 1
        %s315 = scalar_select %p314, %s311, 1
        %s316 = smul.addr %s313, 2
        %s317 = sadd.s32 %s315, %s316
        %s318 = smul.addr %s317, 4
        %s319 = scalar_lea.vmem %s0, %s318
        %s320 = sadd.s32 %s28, %s29
        %s321 = smul.u32 2, %s320
        %s322 = sadd.s32 %s27, %s28
        %v324 = vld [vmem:[%s319] sm:$0xf]
        %v325 = vld [vmem:[%s319 + $0x4] sm:$0xf]
        %v326 = vld [vmem:[#allocation2] sm:$0xf]
        %v327 = vld [vmem:[%s2] sm:$0x1]
        %v329 = vlaneseq
        %v330 = vshrl.u32 %v329, 7
        %v331 = vsub.s32 0, %v330
        %v332 = vrot.slane %v327, %v331
        %v336 = vunpack.c.l.b16 %v324
        %v337 = vunpack.c.l.b16 %v325
        %v338 = vpack.c.b16 %v337, %v336
        %vm339 = vcmask 64512
        %v341 = vsel %vm339, %v338, 0
        %vm343 = vcmask 1043456
        %v345 = vsel %vm343, %v326, 0
        %347 = vmatprep.subr.bf16.mxu0 0
        %348 = vmatpush1.bf16.msra.mxu0 %v345
        %349 = vmatprep.subr.bf16.mxu0 0
        %350 = vmatpush1.bf16.msra.mxu0 0
        %351 = vmatprep.subr.bf16.mxu0 0
        %352 = vmatpush1.bf16.msra.mxu0 0
        %353 = vmatprep.subr.bf16.mxu0 0
        %354 = vmatpush1.bf16.msra.mxu0 0
        %355 = vmatprep.subr.bf16.mxu0 0
        %356 = vmatpush1.bf16.msra.mxu0 0
        %357 = vmatprep.subr.bf16.mxu0 0
        %358 = vmatpush1.bf16.msra.mxu0 0
        %359 = vmatprep.subr.bf16.mxu0 0
        %360 = vmatpush1.bf16.msra.mxu0 0
        %361 = vmatprep.subr.bf16.mxu0 0
        %362 = vmatpush1.bf16.msra.mxu0 0
        %363 = vmatprep.subr.bf16.mxu0 0
        %364 = vmatpush1.bf16.msra.mxu0 0
        %365 = vmatprep.subr.bf16.mxu0 0
        %366 = vmatpush1.bf16.msra.mxu0 0
        %367 = vmatprep.subr.bf16.mxu0 0
        %368 = vmatpush1.bf16.msra.mxu0 0
        %369 = vmatprep.subr.bf16.mxu0 0
        %370 = vmatpush1.bf16.msra.mxu0 0
        %371 = vmatprep.subr.bf16.mxu0 0
        %372 = vmatpush1.bf16.msra.mxu0 0
        %373 = vmatprep.subr.bf16.mxu0 0
        %374 = vmatpush1.bf16.msra.mxu0 0
        %375 = vmatprep.subr.bf16.mxu0 0
        %376 = vmatpush1.bf16.msra.mxu0 0
        %377 = vmatprep.subr.bf16.mxu0 0
        %378 = vmatpush1.bf16.msra.mxu0 0
        %379 = vmatprep.mubr.bf16.mxu0 0
        %380 = vmatmul.mubr.bf16.gmra.mrb[0].mxu0 %v341
        %v381 = vpop.f32.mrb[0].mxu0
        %v382 = vadd.f32 %v332, %v381
        %v383 = vpop.f32.mrb[0].mxu0
        %v384 = vpop.f32.mrb[0].mxu0
        %v385 = vadd.f32 %v332, %v384
        %v386 = vpop.f32.mrb[0].mxu0
        %387 = vdwg.mxu0
        %v388 = vmax.f32 %v382, 0.0
        %v389 = vmax.f32 %v385, 0.0
        %v390 = vpack.c.bf16 %v389, %v388
        %v391 = vld [vmem:[%s3] sm:$0xf]
        %v392 = vld [vmem:[%s3 + $0x4] sm:$0xf]
        %v393 = vld [vmem:[%s3 + $0x8] sm:$0xf]
        %v394 = vld [vmem:[%s3 + $0xc] sm:$0xf]
        %v395 = vld [vmem:[%s3 + $0x10] sm:$0xf]
        %v396 = vld [vmem:[%s3 + $0x14] sm:$0xf]
        %v397 = vld [vmem:[%s3 + $0x18] sm:$0xf]
        %v398 = vld [vmem:[%s3 + $0x1c] sm:$0xf]
        %v399 = vld [vmem:[%s4] sm:$0x1]
        %v401 = vlaneseq
        %v402 = vshrl.u32 %v401, 7
        %v403 = vsub.s32 0, %v402
        %v404 = vrot.slane %v399, %v403
        %v414 = vunpack.c.l.b16 %v391
        %v415 = vunpack.c.l.b16 %v392
        %v416 = vunpack.c.l.b16 %v393
        %v417 = vunpack.c.l.b16 %v394
        %v418 = vunpack.c.l.b16 %v395
        %v419 = vunpack.c.l.b16 %v396
        %v420 = vunpack.c.l.b16 %v397
        %v421 = vunpack.c.l.b16 %v398
        %v422 = vpack.c.b16 %v415, %v414
        %v423 = vpack.c.b16 %v417, %v416
        %v424 = vpack.c.b16 %v419, %v418
        %v425 = vpack.c.b16 %v421, %v420
        %vm430 = vcmask 523264
        %v432 = vsel %vm430, %v390, 0
        %434 = vmatprep.subr.bf16.mxu0 0
        %435 = vmatpush1.bf16.msra.mxu0 %v422
        %436 = vmatprep.subr.bf16.mxu0 0
        %437 = vmatpush1.bf16.msra.mxu0 %v423
        %438 = vmatprep.subr.bf16.mxu0 0
        %439 = vmatpush1.bf16.msra.mxu0 %v424
        %440 = vmatprep.subr.bf16.mxu0 0
        %441 = vmatpush1.bf16.msra.mxu0 %v425
        %442 = vmatprep.subr.bf16.mxu0 0
        %443 = vmatpush1.bf16.msra.mxu0 0
        %444 = vmatprep.subr.bf16.mxu0 0
        %445 = vmatpush1.bf16.msra.mxu0 0
        %446 = vmatprep.subr.bf16.mxu0 0
        %447 = vmatpush1.bf16.msra.mxu0 0
        %448 = vmatprep.subr.bf16.mxu0 0
        %449 = vmatpush1.bf16.msra.mxu0 0
        %450 = vmatprep.subr.bf16.mxu0 0
        %451 = vmatpush1.bf16.msra.mxu0 0
        %452 = vmatprep.subr.bf16.mxu0 0
        %453 = vmatpush1.bf16.msra.mxu0 0
        %454 = vmatprep.subr.bf16.mxu0 0
        %455 = vmatpush1.bf16.msra.mxu0 0
        %456 = vmatprep.subr.bf16.mxu0 0
        %457 = vmatpush1.bf16.msra.mxu0 0
        %458 = vmatprep.subr.bf16.mxu0 0
        %459 = vmatpush1.bf16.msra.mxu0 0
        %460 = vmatprep.subr.bf16.mxu0 0
        %461 = vmatpush1.bf16.msra.mxu0 0
        %462 = vmatprep.subr.bf16.mxu0 0
        %463 = vmatpush1.bf16.msra.mxu0 0
        %464 = vmatprep.subr.bf16.mxu0 0
        %465 = vmatpush1.bf16.msra.mxu0 0
        %466 = vmatprep.mubr.bf16.mxu0 0
        %467 = vmatmul.mubr.bf16.gmra.mrb[0].mxu0 %v432
        %v468 = vpop.f32.mrb[0].mxu0
        %v469 = vadd.f32 %v404, %v468
        %v470 = vpop.f32.mrb[0].mxu0
        %v471 = vpop.f32.mrb[0].mxu0
        %v472 = vadd.f32 %v404, %v471
        %v473 = vpop.f32.mrb[0].mxu0
        %474 = vdwg.mxu0
        %v475 = vmax.f32 %v469, 0.0
        %v476 = vmax.f32 %v472, 0.0
        %v477 = vpack.c.bf16 %v476, %v475
        %v478 = vld [vmem:[#allocation5] sm:$0xff]
        %v479 = vld [vmem:[#allocation5 + $0x8] sm:$0xff]
        %v480 = vld [vmem:[#allocation5 + $0x10] sm:$0xff]
        %v481 = vld [vmem:[#allocation5 + $0x18] sm:$0xff]
        %v482 = vld [vmem:[#allocation5 + $0x20] sm:$0xff]
        %v483 = vld [vmem:[#allocation5 + $0x28] sm:$0xff]
        %v484 = vld [vmem:[#allocation5 + $0x30] sm:$0xff]
        %v485 = vld [vmem:[#allocation5 + $0x38] sm:$0xff]
        %v486 = vld [vmem:[#allocation5 + $0x40] sm:$0xff]
        %v487 = vld [vmem:[#allocation5 + $0x48] sm:$0xff]
        %v488 = vld [vmem:[#allocation5 + $0x50] sm:$0xff]
        %v489 = vld [vmem:[#allocation5 + $0x58] sm:$0xff]
        %v490 = vld [vmem:[#allocation5 + $0x60] sm:$0xff]
        %v491 = vld [vmem:[#allocation5 + $0x68] sm:$0xff]
        %v492 = vld [vmem:[#allocation5 + $0x70] sm:$0xff]
        %v493 = vld [vmem:[#allocation5 + $0x78] sm:$0xff]
        %v494 = vld [vmem:[#allocation5 + $0x80] sm:$0xff]
        %v495 = vld [vmem:[#allocation5 + $0x88] sm:$0xff]
        %v496 = vld [vmem:[#allocation5 + $0x90] sm:$0xff]
        %v497 = vld [vmem:[#allocation5 + $0x98] sm:$0xff]
        %v498 = vld [vmem:[#allocation5 + $0xa0] sm:$0xff]
        %v499 = vld [vmem:[#allocation5 + $0xa8] sm:$0xff]
        %v500 = vld [vmem:[#allocation5 + $0xb0] sm:$0xff]
        %v501 = vld [vmem:[#allocation5 + $0xb8] sm:$0xff]
        %v502 = vld [vmem:[#allocation5 + $0xc0] sm:$0xff]
        %v503 = vld [vmem:[#allocation5 + $0xc8] sm:$0xff]
        %v504 = vld [vmem:[#allocation5 + $0xd0] sm:$0xff]
        %v505 = vld [vmem:[#allocation5 + $0xd8] sm:$0xff]
        %v506 = vld [vmem:[#allocation5 + $0xe0] sm:$0xff]
        %v507 = vld [vmem:[#allocation5 + $0xe8] sm:$0xff]
        %v508 = vld [vmem:[#allocation5 + $0xf0] sm:$0xff]
        %v509 = vld [vmem:[#allocation5 + $0xf8] sm:$0xff]
        %v510 = vld [vmem:[#allocation5 + $0x100] sm:$0xff]
        %v511 = vld [vmem:[#allocation5 + $0x108] sm:$0xff]
        %v512 = vld [vmem:[#allocation5 + $0x110] sm:$0xff]
        %v513 = vld [vmem:[#allocation5 + $0x118] sm:$0xff]
        %v514 = vld [vmem:[#allocation5 + $0x120] sm:$0xff]
        %v515 = vld [vmem:[#allocation5 + $0x128] sm:$0xff]
        %v516 = vld [vmem:[#allocation5 + $0x130] sm:$0xff]
        %v517 = vld [vmem:[#allocation5 + $0x138] sm:$0xff]
        %v518 = vld [vmem:[#allocation5 + $0x140] sm:$0xff]
        %v519 = vld [vmem:[#allocation5 + $0x148] sm:$0xff]
        %v520 = vld [vmem:[#allocation5 + $0x150] sm:$0xff]
        %v521 = vld [vmem:[#allocation5 + $0x158] sm:$0xff]
        %v522 = vld [vmem:[#allocation5 + $0x160] sm:$0xff]
        %v523 = vld [vmem:[#allocation5 + $0x168] sm:$0xff]
        %v524 = vld [vmem:[#allocation5 + $0x170] sm:$0xff]
        %v525 = vld [vmem:[#allocation5 + $0x178] sm:$0xff]
        %v526 = vld [vmem:[#allocation5 + $0x180] sm:$0xff]
        %v527 = vld [vmem:[#allocation5 + $0x188] sm:$0xff]
        %v528 = vld [vmem:[#allocation5 + $0x190] sm:$0xff]
        %v529 = vld [vmem:[#allocation5 + $0x198] sm:$0xff]
        %v530 = vld [vmem:[#allocation5 + $0x1a0] sm:$0xff]
        %v531 = vld [vmem:[#allocation5 + $0x1a8] sm:$0xff]
        %v532 = vld [vmem:[#allocation5 + $0x1b0] sm:$0xff]
        %v533 = vld [vmem:[#allocation5 + $0x1b8] sm:$0xff]
        %v534 = vld [vmem:[#allocation5 + $0x1c0] sm:$0xff]
        %v535 = vld [vmem:[#allocation5 + $0x1c8] sm:$0xff]
        %v536 = vld [vmem:[#allocation5 + $0x1d0] sm:$0xff]
        %v537 = vld [vmem:[#allocation5 + $0x1d8] sm:$0xff]
        %v538 = vld [vmem:[#allocation5 + $0x1e0] sm:$0xff]
        %v539 = vld [vmem:[#allocation5 + $0x1e8] sm:$0xff]
        %v540 = vld [vmem:[#allocation5 + $0x1f0] sm:$0xff]
        %v541 = vld [vmem:[#allocation5 + $0x1f8] sm:$0xff]
        %v606 = vunpack.c.l.b16 %v478
        %v607 = vunpack.c.h.b16 %v478
        %v608 = vunpack.c.l.b16 %v479
        %v609 = vunpack.c.h.b16 %v479
        %v610 = vunpack.c.l.b16 %v480
        %v611 = vunpack.c.h.b16 %v480
        %v612 = vunpack.c.l.b16 %v481
        %v613 = vunpack.c.h.b16 %v481
        %v614 = vunpack.c.l.b16 %v482
        %v615 = vunpack.c.h.b16 %v482
        %v616 = vunpack.c.l.b16 %v483
        %v617 = vunpack.c.h.b16 %v483
        %v618 = vunpack.c.l.b16 %v484
        %v619 = vunpack.c.h.b16 %v484
        %v620 = vunpack.c.l.b16 %v485
        %v621 = vunpack.c.h.b16 %v485
        %v622 = vunpack.c.l.b16 %v486
        %v623 = vunpack.c.h.b16 %v486
        %v624 = vunpack.c.l.b16 %v487
        %v625 = vunpack.c.h.b16 %v487
        %v626 = vunpack.c.l.b16 %v488
        %v627 = vunpack.c.h.b16 %v488
        %v628 = vunpack.c.l.b16 %v489
        %v629 = vunpack.c.h.b16 %v489
        %v630 = vunpack.c.l.b16 %v490
        %v631 = vunpack.c.h.b16 %v490
        %v632 = vunpack.c.l.b16 %v491
        %v633 = vunpack.c.h.b16 %v491
        %v634 = vunpack.c.l.b16 %v492
        %v635 = vunpack.c.h.b16 %v492
        %v636 = vunpack.c.l.b16 %v493
        %v637 = vunpack.c.h.b16 %v493
        %v638 = vunpack.c.l.b16 %v494
        %v639 = vunpack.c.h.b16 %v494
        %v640 = vunpack.c.l.b16 %v495
        %v641 = vunpack.c.h.b16 %v495
        %v642 = vunpack.c.l.b16 %v496
        %v643 = vunpack.c.h.b16 %v496
        %v644 = vunpack.c.l.b16 %v497
        %v645 = vunpack.c.h.b16 %v497
        %v646 = vunpack.c.l.b16 %v498
        %v647 = vunpack.c.h.b16 %v498
        %v648 = vunpack.c.l.b16 %v499
        %v649 = vunpack.c.h.b16 %v499
        %v650 = vunpack.c.l.b16 %v500
        %v651 = vunpack.c.h.b16 %v500
        %v652 = vunpack.c.l.b16 %v501
        %v653 = vunpack.c.h.b16 %v501
        %v654 = vunpack.c.l.b16 %v502
        %v655 = vunpack.c.h.b16 %v502
        %v656 = vunpack.c.l.b16 %v503
        %v657 = vunpack.c.h.b16 %v503
        %v658 = vunpack.c.l.b16 %v504
        %v659 = vunpack.c.h.b16 %v504
        %v660 = vunpack.c.l.b16 %v505
        %v661 = vunpack.c.h.b16 %v505
        %v662 = vunpack.c.l.b16 %v506
        %v663 = vunpack.c.h.b16 %v506
        %v664 = vunpack.c.l.b16 %v507
        %v665 = vunpack.c.h.b16 %v507
        %v666 = vunpack.c.l.b16 %v508
        %v667 = vunpack.c.h.b16 %v508
        %v668 = vunpack.c.l.b16 %v509
        %v669 = vunpack.c.h.b16 %v509
        %v670 = vunpack.c.l.b16 %v510
        %v671 = vunpack.c.h.b16 %v510
        %v672 = vunpack.c.l.b16 %v511
        %v673 = vunpack.c.h.b16 %v511
        %v674 = vunpack.c.l.b16 %v512
        %v675 = vunpack.c.h.b16 %v512
        %v676 = vunpack.c.l.b16 %v513
        %v677 = vunpack.c.h.b16 %v513
        %v678 = vunpack.c.l.b16 %v514
        %v679 = vunpack.c.h.b16 %v514
        %v680 = vunpack.c.l.b16 %v515
        %v681 = vunpack.c.h.b16 %v515
        %v682 = vunpack.c.l.b16 %v516
        %v683 = vunpack.c.h.b16 %v516
        %v684 = vunpack.c.l.b16 %v517
        %v685 = vunpack.c.h.b16 %v517
        %v686 = vunpack.c.l.b16 %v518
        %v687 = vunpack.c.h.b16 %v518
        %v688 = vunpack.c.l.b16 %v519
        %v689 = vunpack.c.h.b16 %v519
        %v690 = vunpack.c.l.b16 %v520
        %v691 = vunpack.c.h.b16 %v520
        %v692 = vunpack.c.l.b16 %v521
        %v693 = vunpack.c.h.b16 %v521
        %v694 = vunpack.c.l.b16 %v522
        %v695 = vunpack.c.h.b16 %v522
        %v696 = vunpack.c.l.b16 %v523
        %v697 = vunpack.c.h.b16 %v523
        %v698 = vunpack.c.l.b16 %v524
        %v699 = vunpack.c.h.b16 %v524
        %v700 = vunpack.c.l.b16 %v525
        %v701 = vunpack.c.h.b16 %v525
        %v702 = vunpack.c.l.b16 %v526
        %v703 = vunpack.c.h.b16 %v526
        %v704 = vunpack.c.l.b16 %v527
        %v705 = vunpack.c.h.b16 %v527
        %v706 = vunpack.c.l.b16 %v528
        %v707 = vunpack.c.h.b16 %v528
        %v708 = vunpack.c.l.b16 %v529
        %v709 = vunpack.c.h.b16 %v529
        %v710 = vunpack.c.l.b16 %v530
        %v711 = vunpack.c.h.b16 %v530
        %v712 = vunpack.c.l.b16 %v531
        %v713 = vunpack.c.h.b16 %v531
        %v714 = vunpack.c.l.b16 %v532
        %v715 = vunpack.c.h.b16 %v532
        %v716 = vunpack.c.l.b16 %v533
        %v717 = vunpack.c.h.b16 %v533
        %v718 = vunpack.c.l.b16 %v534
        %v719 = vunpack.c.h.b16 %v534
        %v720 = vunpack.c.l.b16 %v535
        %v721 = vunpack.c.h.b16 %v535
        %v722 = vunpack.c.l.b16 %v536
        %v723 = vunpack.c.h.b16 %v536
        %v724 = vunpack.c.l.b16 %v537
        %v725 = vunpack.c.h.b16 %v537
        %v726 = vunpack.c.l.b16 %v538
        %v727 = vunpack.c.h.b16 %v538
        %v728 = vunpack.c.l.b16 %v539
        %v729 = vunpack.c.h.b16 %v539
        %v730 = vunpack.c.l.b16 %v540
        %v731 = vunpack.c.h.b16 %v540
        %v732 = vunpack.c.l.b16 %v541
        %v733 = vunpack.c.h.b16 %v541
        %v734 = vpack.c.b16 %v614, %v606
        %v735 = vpack.c.b16 %v615, %v607
        %v736 = vpack.c.b16 %v616, %v608
        %v737 = vpack.c.b16 %v617, %v609
        %v738 = vpack.c.b16 %v618, %v610
        %v739 = vpack.c.b16 %v619, %v611
        %v740 = vpack.c.b16 %v620, %v612
        %v741 = vpack.c.b16 %v621, %v613
        %v742 = vpack.c.b16 %v630, %v622
        %v743 = vpack.c.b16 %v631, %v623
        %v744 = vpack.c.b16 %v632, %v624
        %v745 = vpack.c.b16 %v633, %v625
        %v746 = vpack.c.b16 %v634, %v626
        %v747 = vpack.c.b16 %v635, %v627
        %v748 = vpack.c.b16 %v636, %v628
        %v749 = vpack.c.b16 %v637, %v629
        %v750 = vpack.c.b16 %v646, %v638
        %v751 = vpack.c.b16 %v647, %v639
        %v752 = vpack.c.b16 %v648, %v640
        %v753 = vpack.c.b16 %v649, %v641
        %v754 = vpack.c.b16 %v650, %v642
        %v755 = vpack.c.b16 %v651, %v643
        %v756 = vpack.c.b16 %v652, %v644
        %v757 = vpack.c.b16 %v653, %v645
        %v758 = vpack.c.b16 %v662, %v654
        %v759 = vpack.c.b16 %v663, %v655
        %v760 = vpack.c.b16 %v664, %v656
        %v761 = vpack.c.b16 %v665, %v657
        %v762 = vpack.c.b16 %v666, %v658
        %v763 = vpack.c.b16 %v667, %v659
        %v764 = vpack.c.b16 %v668, %v660
        %v765 = vpack.c.b16 %v669, %v661
        %v766 = vpack.c.b16 %v678, %v670
        %v767 = vpack.c.b16 %v679, %v671
        %v768 = vpack.c.b16 %v680, %v672
        %v769 = vpack.c.b16 %v681, %v673
        %v770 = vpack.c.b16 %v682, %v674
        %v771 = vpack.c.b16 %v683, %v675
        %v772 = vpack.c.b16 %v684, %v676
        %v773 = vpack.c.b16 %v685, %v677
        %v774 = vpack.c.b16 %v694, %v686
        %v775 = vpack.c.b16 %v695, %v687
        %v776 = vpack.c.b16 %v696, %v688
        %v777 = vpack.c.b16 %v697, %v689
        %v778 = vpack.c.b16 %v698, %v690
        %v779 = vpack.c.b16 %v699, %v691
        %v780 = vpack.c.b16 %v700, %v692
        %v781 = vpack.c.b16 %v701, %v693
        %v782 = vpack.c.b16 %v710, %v702
        %v783 = vpack.c.b16 %v711, %v703
        %v784 = vpack.c.b16 %v712, %v704
        %v785 = vpack.c.b16 %v713, %v705
        %v786 = vpack.c.b16 %v714, %v706
        %v787 = vpack.c.b16 %v715, %v707
        %v788 = vpack.c.b16 %v716, %v708
        %v789 = vpack.c.b16 %v717, %v709
        %v790 = vpack.c.b16 %v726, %v718
        %v791 = vpack.c.b16 %v727, %v719
        %v792 = vpack.c.b16 %v728, %v720
        %v793 = vpack.c.b16 %v729, %v721
        %v794 = vpack.c.b16 %v730, %v722
        %v795 = vpack.c.b16 %v731, %v723
        %v796 = vpack.c.b16 %v732, %v724
        %v797 = vpack.c.b16 %v733, %v725
        %862 = vmatprep.subr.bf16.mxu0 %v735
        %863 = vmatpush1.bf16.msra.mxu0 %v734
        %864 = vmatprep.subr.bf16.mxu0 %v743
        %865 = vmatpush1.bf16.msra.mxu0 %v742
        %866 = vmatprep.subr.bf16.mxu0 %v751
        %867 = vmatpush1.bf16.msra.mxu0 %v750
        %868 = vmatprep.subr.bf16.mxu0 %v759
        %869 = vmatpush1.bf16.msra.mxu0 %v758
        %870 = vmatprep.subr.bf16.mxu0 %v767
        %871 = vmatpush1.bf16.msra.mxu0 %v766
        %872 = vmatprep.subr.bf16.mxu0 %v775
        %873 = vmatpush1.bf16.msra.mxu0 %v774
        %874 = vmatprep.subr.bf16.mxu0 %v783
        %875 = vmatpush1.bf16.msra.mxu0 %v782
        %876 = vmatprep.subr.bf16.mxu0 %v791
        %877 = vmatpush1.bf16.msra.mxu0 %v790
        %878 = vmatprep.subr.bf16.mxu0 0
        %879 = vmatpush1.bf16.msra.mxu0 0
        %880 = vmatprep.subr.bf16.mxu0 0
        %881 = vmatpush1.bf16.msra.mxu0 0
        %882 = vmatprep.subr.bf16.mxu0 0
        %883 = vmatpush1.bf16.msra.mxu0 0
        %884 = vmatprep.subr.bf16.mxu0 0
        %885 = vmatpush1.bf16.msra.mxu0 0
        %886 = vmatprep.subr.bf16.mxu0 0
        %887 = vmatpush1.bf16.msra.mxu0 0
        %888 = vmatprep.subr.bf16.mxu0 0
        %889 = vmatpush1.bf16.msra.mxu0 0
        %890 = vmatprep.subr.bf16.mxu0 0
        %891 = vmatpush1.bf16.msra.mxu0 0
        %892 = vmatprep.subr.bf16.mxu0 0
        %893 = vmatpush1.bf16.msra.mxu0 0
        %894 = vmatprep.mubr.bf16.mxu0 0
        %895 = vmatmul.mubr.bf16.gmra.mrb[0].mxu0 %v477
        %v896 = vpop.f32.mrb[0].mxu0
        %v897 = vadd.f32 0.0, %v896
        %v898 = vpop.f32.mrb[0].mxu0
        %v899 = vadd.f32 0.0, %v898
        %v900 = vpop.f32.mrb[0].mxu0
        %v901 = vadd.f32 0.0, %v900
        %v902 = vpop.f32.mrb[0].mxu0
        %v903 = vadd.f32 0.0, %v902
        %904 = vdwg.mxu0
        %905 = vmatprep.subr.bf16.mxu0 %v737
        %906 = vmatpush1.bf16.msra.mxu0 %v736
        %907 = vmatprep.subr.bf16.mxu0 %v745
        %908 = vmatpush1.bf16.msra.mxu0 %v744
        %909 = vmatprep.subr.bf16.mxu0 %v753
        %910 = vmatpush1.bf16.msra.mxu0 %v752
        %911 = vmatprep.subr.bf16.mxu0 %v761
        %912 = vmatpush1.bf16.msra.mxu0 %v760
        %913 = vmatprep.subr.bf16.mxu0 %v769
        %914 = vmatpush1.bf16.msra.mxu0 %v768
        %915 = vmatprep.subr.bf16.mxu0 %v777
        %916 = vmatpush1.bf16.msra.mxu0 %v776
        %917 = vmatprep.subr.bf16.mxu0 %v785
        %918 = vmatpush1.bf16.msra.mxu0 %v784
        %919 = vmatprep.subr.bf16.mxu0 %v793
        %920 = vmatpush1.bf16.msra.mxu0 %v792
        %921 = vmatprep.subr.bf16.mxu0 0
        %922 = vmatpush1.bf16.msra.mxu0 0
        %923 = vmatprep.subr.bf16.mxu0 0
        %924 = vmatpush1.bf16.msra.mxu0 0
        %925 = vmatprep.subr.bf16.mxu0 0
        %926 = vmatpush1.bf16.msra.mxu0 0
        %927 = vmatprep.subr.bf16.mxu0 0
        %928 = vmatpush1.bf16.msra.mxu0 0
        %929 = vmatprep.subr.bf16.mxu0 0
        %930 = vmatpush1.bf16.msra.mxu0 0
        %931 = vmatprep.subr.bf16.mxu0 0
        %932 = vmatpush1.bf16.msra.mxu0 0
        %933 = vmatprep.subr.bf16.mxu0 0
        %934 = vmatpush1.bf16.msra.mxu0 0
        %935 = vmatprep.subr.bf16.mxu0 0
        %936 = vmatpush1.bf16.msra.mxu0 0
        %937 = vmatprep.mubr.bf16.mxu0 0
        %938 = vmatmul.mubr.bf16.gmra.mrb[0].mxu0 %v477
        %v939 = vpop.f32.mrb[0].mxu0
        %v940 = vadd.f32 0.0, %v939
        %v941 = vpop.f32.mrb[0].mxu0
        %v942 = vadd.f32 0.0, %v941
        %v943 = vpop.f32.mrb[0].mxu0
        %v944 = vadd.f32 0.0, %v943
        %v945 = vpop.f32.mrb[0].mxu0
        %v946 = vadd.f32 0.0, %v945
        %947 = vdwg.mxu0
        %948 = vmatprep.subr.bf16.mxu0 %v739
        %949 = vmatpush1.bf16.msra.mxu0 %v738
        %950 = vmatprep.subr.bf16.mxu0 %v747
        %951 = vmatpush1.bf16.msra.mxu0 %v746
        %952 = vmatprep.subr.bf16.mxu0 %v755
        %953 = vmatpush1.bf16.msra.mxu0 %v754
        %954 = vmatprep.subr.bf16.mxu0 %v763
        %955 = vmatpush1.bf16.msra.mxu0 %v762
        %956 = vmatprep.subr.bf16.mxu0 %v771
        %957 = vmatpush1.bf16.msra.mxu0 %v770
        %958 = vmatprep.subr.bf16.mxu0 %v779
        %959 = vmatpush1.bf16.msra.mxu0 %v778
        %960 = vmatprep.subr.bf16.mxu0 %v787
        %961 = vmatpush1.bf16.msra.mxu0 %v786
        %962 = vmatprep.subr.bf16.mxu0 %v795
        %963 = vmatpush1.bf16.msra.mxu0 %v794
        %964 = vmatprep.subr.bf16.mxu0 0
        %965 = vmatpush1.bf16.msra.mxu0 0
        %966 = vmatprep.subr.bf16.mxu0 0
        %967 = vmatpush1.bf16.msra.mxu0 0
        %968 = vmatprep.subr.bf16.mxu0 0
        %969 = vmatpush1.bf16.msra.mxu0 0
        %970 = vmatprep.subr.bf16.mxu0 0
        %971 = vmatpush1.bf16.msra.mxu0 0
        %972 = vmatprep.subr.bf16.mxu0 0
        %973 = vmatpush1.bf16.msra.mxu0 0
        %974 = vmatprep.subr.bf16.mxu0 0
        %975 = vmatpush1.bf16.msra.mxu0 0
        %976 = vmatprep.subr.bf16.mxu0 0
        %977 = vmatpush1.bf16.msra.mxu0 0
        %978 = vmatprep.subr.bf16.mxu0 0
        %979 = vmatpush1.bf16.msra.mxu0 0
        %980 = vmatprep.mubr.bf16.mxu0 0
        %981 = vmatmul.mubr.bf16.gmra.mrb[0].mxu0 %v477
        %v982 = vpop.f32.mrb[0].mxu0
        %v983 = vadd.f32 0.0, %v982
        %v984 = vpop.f32.mrb[0].mxu0
        %v985 = vadd.f32 0.0, %v984
        %v986 = vpop.f32.mrb[0].mxu0
        %v987 = vadd.f32 0.0, %v986
        %v988 = vpop.f32.mrb[0].mxu0
        %v989 = vadd.f32 0.0, %v988
        %990 = vdwg.mxu0
        %991 = vmatprep.subr.bf16.mxu0 %v741
        %992 = vmatpush1.bf16.msra.mxu0 %v740
        %993 = vmatprep.subr.bf16.mxu0 %v749
        %994 = vmatpush1.bf16.msra.mxu0 %v748
        %995 = vmatprep.subr.bf16.mxu0 %v757
        %996 = vmatpush1.bf16.msra.mxu0 %v756
        %997 = vmatprep.subr.bf16.mxu0 %v765
        %998 = vmatpush1.bf16.msra.mxu0 %v764
        %999 = vmatprep.subr.bf16.mxu0 %v773
        %1000 = vmatpush1.bf16.msra.mxu0 %v772
        %1001 = vmatprep.subr.bf16.mxu0 %v781
        %1002 = vmatpush1.bf16.msra.mxu0 %v780
        %1003 = vmatprep.subr.bf16.mxu0 %v789
        %1004 = vmatpush1.bf16.msra.mxu0 %v788
        %1005 = vmatprep.subr.bf16.mxu0 %v797
        %1006 = vmatpush1.bf16.msra.mxu0 %v796
        %1007 = vmatprep.subr.bf16.mxu0 0
        %1008 = vmatpush1.bf16.msra.mxu0 0
        %1009 = vmatprep.subr.bf16.mxu0 0
        %1010 = vmatpush1.bf16.msra.mxu0 0
        %1011 = vmatprep.subr.bf16.mxu0 0
        %1012 = vmatpush1.bf16.msra.mxu0 0
        %1013 = vmatprep.subr.bf16.mxu0 0
        %1014 = vmatpush1.bf16.msra.mxu0 0
        %1015 = vmatprep.subr.bf16.mxu0 0
        %1016 = vmatpush1.bf16.msra.mxu0 0
        %1017 = vmatprep.subr.bf16.mxu0 0
        %1018 = vmatpush1.bf16.msra.mxu0 0
        %1019 = vmatprep.subr.bf16.mxu0 0
        %1020 = vmatpush1.bf16.msra.mxu0 0
        %1021 = vmatprep.subr.bf16.mxu0 0
        %1022 = vmatpush1.bf16.msra.mxu0 0
        %1023 = vmatprep.mubr.bf16.mxu0 0
        %1024 = vmatmul.mubr.bf16.gmra.mrb[0].mxu0 %v477
        %v1025 = vpop.f32.mrb[0].mxu0
        %v1026 = vadd.f32 0.0, %v1025
        %v1027 = vpop.f32.mrb[0].mxu0
        %v1028 = vadd.f32 0.0, %v1027
        %v1029 = vpop.f32.mrb[0].mxu0
        %v1030 = vadd.f32 0.0, %v1029
        %v1031 = vpop.f32.mrb[0].mxu0
        %v1032 = vadd.f32 0.0, %v1031
        %1033 = vdwg.mxu0
        %v1034 = vmax.f32 %v897, %v901
        %v1035 = vrot.slane %v1034, 4
        %v1036 = vmax.f32 %v1034, %v1035
        %v1037 = vrot.slane %v1036, 2
        %v1038 = vmax.f32 %v1036, %v1037
        %v1039 = vrot.slane %v1038, 1
        %v1040 = vmax.f32 %v1038, %v1039
        %v1041 = vmax.f32 %v899, %v903
        %v1042 = vrot.slane %v1041, 4
        %v1043 = vmax.f32 %v1041, %v1042
        %v1044 = vrot.slane %v1043, 2
        %v1045 = vmax.f32 %v1043, %v1044
        %v1046 = vrot.slane %v1045, 1
        %v1047 = vmax.f32 %v1045, %v1046
        %v1048 = vmax.f32 %v940, %v944
        %v1049 = vrot.slane %v1048, 4
        %v1050 = vmax.f32 %v1048, %v1049
        %v1051 = vrot.slane %v1050, 2
        %v1052 = vmax.f32 %v1050, %v1051
        %v1053 = vrot.slane %v1052, 1
        %v1054 = vmax.f32 %v1052, %v1053
        %v1055 = vmax.f32 %v942, %v946
        %v1056 = vrot.slane %v1055, 4
        %v1057 = vmax.f32 %v1055, %v1056
        %v1058 = vrot.slane %v1057, 2
        %v1059 = vmax.f32 %v1057, %v1058
        %v1060 = vrot.slane %v1059, 1
        %v1061 = vmax.f32 %v1059, %v1060
        %v1062 = vmax.f32 %v983, %v987
        %v1063 = vrot.slane %v1062, 4
        %v1064 = vmax.f32 %v1062, %v1063
        %v1065 = vrot.slane %v1064, 2
        %v1066 = vmax.f32 %v1064, %v1065
        %v1067 = vrot.slane %v1066, 1
        %v1068 = vmax.f32 %v1066, %v1067
        %v1069 = vmax.f32 %v985, %v989
        %v1070 = vrot.slane %v1069, 4
        %v1071 = vmax.f32 %v1069, %v1070
        %v1072 = vrot.slane %v1071, 2
        %v1073 = vmax.f32 %v1071, %v1072
        %v1074 = vrot.slane %v1073, 1
        %v1075 = vmax.f32 %v1073, %v1074
        %v1076 = vmax.f32 %v1026, %v1030
        %v1077 = vrot.slane %v1076, 4
        %v1078 = vmax.f32 %v1076, %v1077
        %v1079 = vrot.slane %v1078, 2
        %v1080 = vmax.f32 %v1078, %v1079
        %v1081 = vrot.slane %v1080, 1
        %v1082 = vmax.f32 %v1080, %v1081
        %v1083 = vmax.f32 %v1028, %v1032
        %v1084 = vrot.slane %v1083, 4
        %v1085 = vmax.f32 %v1083, %v1084
        %v1086 = vrot.slane %v1085, 2
        %v1087 = vmax.f32 %v1085, %v1086
        %v1088 = vrot.slane %v1087, 1
        %v1089 = vmax.f32 %v1087, %v1088
        %p1090 = scmp.eq.s32.totalorder %s29, 0
        // Predicated region
        $region53: #{tpu_custom_call.1} parent=43 // pred_check
          %p1091 = pneg %p1090
        $region54: #{tpu_custom_call.1} parent=43 // pred_check_branch
          %1093 = sbr.rel (%p1091) target = $region56
        $region55: #{tpu_custom_call.1} parent=43 // pred_region
          %v1102 = vcombine.low %v1040, %v1047
          %v1103 = vcombine.low %v1054, %v1061
          %v1104 = vcombine.low %v1068, %v1075
          %v1105 = vcombine.low %v1082, %v1089
          %v1107 = vunpack.c.l.s4 1966171168
          %v1108 = vunpack.c.0.s8 %v1107
          %v1109 = vlaneseq
          %v1110 = vshrl.u32 %v1109, 7
          %v1111 = vsub.s32 %v1108, %v1110
          %v1112 = vrot.slane %v1102, %v1111
          %v1114 = vunpack.c.l.s4 1966171168
          %v1115 = vunpack.c.0.s8 %v1114
          %v1116 = vlaneseq
          %v1117 = vshrl.u32 %v1116, 7
          %v1118 = vsub.s32 %v1115, %v1117
          %v1119 = vrot.slane %v1103, %v1118
          %v1121 = vunpack.c.l.s4 1966171168
          %v1122 = vunpack.c.0.s8 %v1121
          %v1123 = vlaneseq
          %v1124 = vshrl.u32 %v1123, 7
          %v1125 = vsub.s32 %v1122, %v1124
          %v1126 = vrot.slane %v1104, %v1125
          %v1128 = vunpack.c.l.s4 1966171168
          %v1129 = vunpack.c.0.s8 %v1128
          %v1130 = vlaneseq
          %v1131 = vshrl.u32 %v1130, 7
          %v1132 = vsub.s32 %v1129, %v1131
          %v1133 = vrot.slane %v1105, %v1132
          %v1134 = vcombine.low %v1112, %v1119
          %v1135 = vcombine.low %v1126, %v1133
          %v1137 = vunpack.c.l.s4 1966171168
          %v1138 = vunpack.c.0.s8 %v1137
          %v1139 = vlaneseq
          %v1140 = vshrl.u32 %v1139, 7
          %v1141 = vsub.s32 %v1138, %v1140
          %v1142 = vrot.slane %v1134, %v1141
          %v1144 = vunpack.c.l.s4 1966171168
          %v1145 = vunpack.c.0.s8 %v1144
          %v1146 = vlaneseq
          %v1147 = vshrl.u32 %v1146, 7
          %v1148 = vsub.s32 %v1145, %v1147
          %v1149 = vrot.slane %v1135, %v1148
          %v1150 = vcombine.low %v1142, %v1149
          %1152 = vst [vmem:[%s309] sm:$0xff] %v1150
        $region56: #{tpu_custom_call.1} parent=43 // pred_fallthru
          _
        %p1153 = scmp.ne.s32.totalorder %s29, 0
        // Predicated region
        $region57: #{tpu_custom_call.1} parent=43 // pred_check
          %p1154 = pneg %p1153
        $region58: #{tpu_custom_call.1} parent=43 // pred_check_branch
          %1156 = sbr.rel (%p1154) target = $region60
        $region59: #{tpu_custom_call.1} parent=43 // pred_region
          %v1157 = vld [vmem:[%s309] sm:$0xff]
          %v1166 = vcombine.low %v1040, %v1047
          %v1167 = vcombine.low %v1054, %v1061
          %v1168 = vcombine.low %v1068, %v1075
          %v1169 = vcombine.low %v1082, %v1089
          %v1171 = vunpack.c.l.s4 1966171168
          %v1172 = vunpack.c.0.s8 %v1171
          %v1173 = vlaneseq
          %v1174 = vshrl.u32 %v1173, 7
          %v1175 = vsub.s32 %v1172, %v1174
          %v1176 = vrot.slane %v1166, %v1175
          %v1178 = vunpack.c.l.s4 1966171168
          %v1179 = vunpack.c.0.s8 %v1178
          %v1180 = vlaneseq
          %v1181 = vshrl.u32 %v1180, 7
          %v1182 = vsub.s32 %v1179, %v1181
          %v1183 = vrot.slane %v1167, %v1182
          %v1185 = vunpack.c.l.s4 1966171168
          %v1186 = vunpack.c.0.s8 %v1185
          %v1187 = vlaneseq
          %v1188 = vshrl.u32 %v1187, 7
          %v1189 = vsub.s32 %v1186, %v1188
          %v1190 = vrot.slane %v1168, %v1189
          %v1192 = vunpack.c.l.s4 1966171168
          %v1193 = vunpack.c.0.s8 %v1192
          %v1194 = vlaneseq
          %v1195 = vshrl.u32 %v1194, 7
          %v1196 = vsub.s32 %v1193, %v1195
          %v1197 = vrot.slane %v1169, %v1196
          %v1198 = vcombine.low %v1176, %v1183
          %v1199 = vcombine.low %v1190, %v1197
          %v1201 = vunpack.c.l.s4 1966171168
          %v1202 = vunpack.c.0.s8 %v1201
          %v1203 = vlaneseq
          %v1204 = vshrl.u32 %v1203, 7
          %v1205 = vsub.s32 %v1202, %v1204
          %v1206 = vrot.slane %v1198, %v1205
          %v1208 = vunpack.c.l.s4 1966171168
          %v1209 = vunpack.c.0.s8 %v1208
          %v1210 = vlaneseq
          %v1211 = vshrl.u32 %v1210, 7
          %v1212 = vsub.s32 %v1209, %v1211
          %v1213 = vrot.slane %v1199, %v1212
          %v1214 = vcombine.low %v1206, %v1213
          %v1216 = vmax.f32 %v1157, %v1214
          %1217 = vst [vmem:[%s309] sm:$0xff] %v1216
        $region60: #{tpu_custom_call.1} parent=43 // pred_fallthru
          _
        %s1218 = sand.u32 %s186, 1
        %s1219 = scalar_lea.sflag [#allocation4], %s1218
        %s1220 = sand.u32 %s186, 1
        %s1221 = smul.addr %s1220, 8
        %s1222 = scalar_lea.vmem [#allocation7], %s1221
        // Predicated region
        $region61: #{tpu_custom_call.1} parent=43 // pred_check
          %p1223 = pneg %p196
        $region62: #{tpu_custom_call.1} parent=43 // pred_check_branch
          %1225 = sbr.rel (%p1223) target = $region64
        $region63: #{tpu_custom_call.1} parent=43 // pred_region
          %s1226 = sadd.s32 %s27, %s28
          %s1228 = ssub.s32 128, 128
          %1229 = vsyncadd %s1219, %s1228
          %s1230 = smul.addr %s1226, 8
          %s1231 = smul.addr %s1230, 16
          %s1232 = scalar_lea.hbm %s6, %s1231
          %s1234 = sshll.u32 %s1222, 4
          %s1235 = int_to_ptr.vmem [resolvable:$true] %s1234
          %1237 = dma.vmem_to_hbm [thread:$0]  %s1235, 128, %s1232, %s1219
        $region64: #{tpu_custom_call.1} parent=43 // pred_fallthru
          _
      $region44: #{tpu_custom_call.1} parent=5 // pred_fallthru
        _
      %p1238 = scmp.le.s32.totalorder 2, %s17
      // Predicated region
      $region65: #{tpu_custom_call.1} parent=5 // pred_check
        %p1239 = pneg %p1238
      $region66: #{tpu_custom_call.1} parent=5 // pred_check_branch
        %1241 = sbr.rel (%p1239) target = $region68
      $region67: #{tpu_custom_call.1} parent=5 // pred_region
        %s1242 = ssub.s32 %s17, 2
        // Predicated region
        $region69: #{tpu_custom_call.1} parent=67 // pred_check
          %p1243 = pneg %p202
        $region70: #{tpu_custom_call.1} parent=67 // pred_check_branch
          %1245 = sbr.rel (%p1243) target = $region72
        $region71: #{tpu_custom_call.1} parent=67 // pred_region
          %s1246 = sand.u32 %s187, 1
          %s1247 = scalar_lea.sflag [#allocation4], %s1246
          %s1248 = sand.u32 %s187, 1
          %s1249 = smul.addr %s1248, 8
          %s1250 = scalar_lea.vmem [#allocation7], %s1249
          %1251 = dma.done %s1247, 128
        $region72: #{tpu_custom_call.1} parent=67 // pred_fallthru
          _
      $region68: #{tpu_custom_call.1} parent=5 // pred_fallthru
        _
    $region6: #{tpu_custom_call.1} parent=1 // loop_footer
      %s21 = sadd.s32 1, %s17
    $region7: #{tpu_custom_call.1} parent=1 // loop_footer_branch
      %16 = sbr.rel target = $region3
    $region8: #{tpu_custom_call.1} parent=1 // loop_exit
      _
    %1252 = vsyncpa [#allocation3], 1
    %s1253 = scalar_lea.sflag [#allocation3], 1
    %1254 = vsyncpa %s1253, 1
    %1255 = vsyncpa [#allocation6], 1
    %1256 = vsyncpa [#allocation4], 1
    %s1257 = scalar_lea.sflag [#allocation4], 1
    %1258 = vsyncpa %s1257, 1

</llo_original>
